<compile_context>
chip_gen: v6e
topology: v6e:2x2x1
jax: 0.10.0
libtpu: 0.0.40
codegen_flags: <defaults>
</compile_context>

<pallas_src>
import functools

import jax
import jax.numpy as jnp
from jax import lax
from jax.experimental import pallas as pl
from jax.experimental.pallas import tpu as pltpu


def _fused_transition_down_kernel(
        # scalar prefetch (SMEM)
        pflat_ref,        # (B*3*N,) f32 : p in (B, 3, N) order, flattened
        # inputs (VMEM blocks)
        p_ref,            # (1, N, 3)  row layout (p_out row copies)
        pt_ref,           # (1, 3, N)  lane-dense coordinates
        x_ref,            # (1, N, Cin) input features
        w_ref,            # (Cin, Cp)  Conv1d(k=1) weight^T, Cp = Cout pad 128
        scale_ref,        # (1, Cp)    folded eval-mode BatchNorm scale
        bias_ref,         # (1, Cp)    folded eval-mode BatchNorm bias
        # outputs
        y_ref,            # (1, M, Cp)
        pout_ref,         # (1, M, 3)
        # scratch
        dists_scr,        # (M, N) f32  shared FPS/kNN distance rows
        feats_scr,        # (N, Cp) bf16 (max pool) / f32 (mean pool)
        pool_scr,         # (M, Cp) f32 (max) / (M, N) f32 (mean: 1/k one-hots)
        *, n, m_samples, k, local_max_pooling):
    b = pl.program_id(0)
    base = b * (3 * n)

    # ---- shared MLP: Conv1d(k=1, no bias) + folded BN + ReLU, on the MXU ----
    feats = jnp.dot(x_ref[0], w_ref[...], preferred_element_type=jnp.float32)
    feats = jnp.maximum(feats * scale_ref[...] + bias_ref[...], 0.0)   # (N, Cp)
    feats_scr[...] = feats.astype(feats_scr.dtype)

    # ---- farthest point sampling: serial, VPU-only per-iteration update ----
    pt = pt_ref[0]                                  # (3, N) lane-dense
    pt0 = pt[0:1, :]
    pt1 = pt[1:2, :]
    pt2 = pt[2:3, :]
    p_sq = pt0 * pt0 + pt1 * pt1 + pt2 * pt2        # (1, N)

    def fps_body(i, carry):
        cur, min_dist = carry
        # record the sampled point (bit-exact copy); off the serial
        # min_dist -> argmax -> cur dependence chain, so its latency hides.
        pout_ref[0, pl.ds(i, 1), :] = p_ref[0, pl.ds(cur, 1), :]
        # selected coordinates as SMEM scalars (no MXU, no FIFO pop latency).
        s0 = pflat_ref[base + cur]
        s1 = pflat_ref[base + n + cur]
        s2 = pflat_ref[base + 2 * n + cur]
        d = p_sq + (s0 * s0 + s1 * s1 + s2 * s2) \
            - 2.0 * (s0 * pt0 + s1 * pt1 + s2 * pt2)
        d = jnp.maximum(d, 0.0)                      # (1, N)
        dists_scr[pl.ds(i, 1), :] = d                # == kNN row for query i
        min_dist = jnp.minimum(min_dist, d)
        new_cur = jnp.argmax(min_dist, axis=1)[0].astype(jnp.int32)
        return new_cur, min_dist

    lax.fori_loop(
        0, m_samples, fps_body,
        (jnp.int32(0), jnp.full((1, n), jnp.inf, dtype=jnp.float32)))

    # ---- k nearest neighbours + local pooling over dists_scr ----
    iota_n = lax.broadcasted_iota(jnp.int32, (m_samples, n), 1)
    big = jnp.float32(1e30)

    if local_max_pooling:
        pool_scr[...] = jnp.full(pool_scr.shape, -jnp.inf, dtype=pool_scr.dtype)

        def pool_body(_, carry):
            dd = dists_scr[...]
            idx = jnp.argmin(dd, axis=1).astype(jnp.int32)          # (M,)
            hit = iota_n == idx[:, None]                            # (M, N)
            # bf16 one-hot gather (exact selection), f32 accumulate.
            g = jnp.dot(hit.astype(feats_scr.dtype), feats_scr[...],
                        preferred_element_type=jnp.float32)
            pool_scr[...] = jnp.maximum(pool_scr[...], g)
            dists_scr[...] = dd + hit.astype(jnp.float32) * big     # mask visited
            return carry

        lax.fori_loop(0, k, pool_body, 0)
        y_ref[0] = pool_scr[...].astype(y_ref.dtype)
    else:
        # mean pooling: accumulate 1/k-scaled one-hot masks, gather ONCE (f32).
        pool_scr[...] = jnp.zeros(pool_scr.shape, dtype=pool_scr.dtype)
        inv_k = jnp.float32(1.0 / k)

        def pool_body(_, carry):
            dd = dists_scr[...]
            idx = jnp.argmin(dd, axis=1).astype(jnp.int32)
            hit = (iota_n == idx[:, None]).astype(jnp.float32)
            pool_scr[...] = pool_scr[...] + hit * inv_k
            dists_scr[...] = dd + hit * big
            return carry

        lax.fori_loop(0, k, pool_body, 0)
        y_ref[0] = jnp.dot(pool_scr[...], feats_scr[...],
                           preferred_element_type=jnp.float32).astype(y_ref.dtype)


# ---------------------------------------------------------------------------
# Wrapper
# ---------------------------------------------------------------------------
def transition_down(x, p, w_mat, bn_scale, bn_bias, *, k, sampling_ratio,
                    local_max_pooling=True):
    """x:(B,N,Cin), p:(B,N,3) -> (y:(B,M,Cout), p_out:(B,M,3)), M=int(N*ratio)."""
    B, N, Cin = x.shape
    Cout = w_mat.shape[1]
    M = int(N * sampling_ratio)
    assert 1 <= k <= N, "k must be in [1, N]"
    assert 1 <= M <= N

    # lane-dense coordinate layout (N on the 128-lane axis) + flat SMEM copy
    # for the scalar reads inside the FPS serial loop.
    p_t = jnp.transpose(p, (0, 2, 1))                       # (B, 3, N)
    p_flat = p_t.reshape(B * 3 * N)                          # scalar prefetch

    # pad out_channels up to a multiple of 128 lanes; zero weight/scale/bias
    # columns make the padded feature columns exactly 0, sliced off below.
    Cp = ((Cout + 127) // 128) * 128
    if Cp != Cout:
        w_p = jnp.zeros((Cin, Cp), w_mat.dtype).at[:, :Cout].set(w_mat)
        scale_p = jnp.zeros((1, Cp), bn_scale.dtype).at[:, :Cout].set(bn_scale)
        bias_p = jnp.zeros((1, Cp), bn_bias.dtype).at[:, :Cout].set(bn_bias)
    else:
        w_p, scale_p, bias_p = w_mat, bn_scale, bn_bias

    feats_dtype = jnp.bfloat16 if local_max_pooling else jnp.float32
    feats_bytes = 2 if local_max_pooling else 4
    pool_shape = (M, Cp) if local_max_pooling else (M, N)

    # explicit scoped-VMEM limit (v5e default is only 16 MiB): double-buffered
    # blocks + scratch, with headroom, capped below v7x's 64 MiB physical.
    est = (2 * 4 * (N * 3 + 3 * N + N * Cin + Cin * Cp + 2 * Cp)    # inputs
           + 2 * 4 * (M * Cp + M * 3)                               # outputs
           + 4 * M * N + feats_bytes * N * Cp
           + 4 * pool_shape[0] * pool_shape[1])                     # scratch
    vmem_limit = int(min(max(3 * est, 20 << 20), 48 << 20))

    grid_spec = pltpu.PrefetchScalarGridSpec(
        num_scalar_prefetch=1,
        grid=(B,),
        in_specs=[
            pl.BlockSpec((1, N, 3), lambda b, pf: (b, 0, 0)),     # p rows
            pl.BlockSpec((1, 3, N), lambda b, pf: (b, 0, 0)),     # lane-dense p
            pl.BlockSpec((1, N, Cin), lambda b, pf: (b, 0, 0)),   # features x
            pl.BlockSpec((Cin, Cp), lambda b, pf: (0, 0)),        # conv1d W^T
            pl.BlockSpec((1, Cp), lambda b, pf: (0, 0)),          # BN scale
            pl.BlockSpec((1, Cp), lambda b, pf: (0, 0)),          # BN bias
        ],
        out_specs=[
            pl.BlockSpec((1, M, Cp), lambda b, pf: (b, 0, 0)),    # y (padded)
            pl.BlockSpec((1, M, 3), lambda b, pf: (b, 0, 0)),     # p_out
        ],
        scratch_shapes=[
            pltpu.VMEM((M, N), jnp.float32),       # shared FPS/kNN distances
            pltpu.VMEM((N, Cp), feats_dtype),      # MLP features (stay in VMEM)
            pltpu.VMEM(pool_shape, jnp.float32),   # pooled acc / mean one-hots
        ],
    )

    y_full, p_out = pl.pallas_call(
        functools.partial(_fused_transition_down_kernel, n=N, m_samples=M, k=k,
                          local_max_pooling=local_max_pooling),
        out_shape=(jax.ShapeDtypeStruct((B, M, Cp), jnp.float32),
                   jax.ShapeDtypeStruct((B, M, 3), jnp.float32)),
        grid_spec=grid_spec,
        compiler_params=pltpu.CompilerParams(
            dimension_semantics=("parallel",),
            vmem_limit_bytes=vmem_limit),
    )(p_flat, p, p_t, x, w_p, scale_p, bias_p)

    y = y_full[:, :, :Cout] if Cp != Cout else y_full
    return y, p_out


if __name__ == "__main__":
    key = jax.random.PRNGKey(0)
    # shapes consistent with the first TransitionDown of PointTransformerCls:
    # channels 16 -> 32, k = 16, sampling_ratio = 0.25 (small N for the test).
    B, N, Cin, Cout, k = 2, 64, 16, 32, 16
    sampling_ratio = 0.25
    M = int(N * sampling_ratio)

    kx, kp, kw = jax.random.split(key, 3)
    x = jax.random.normal(kx, (B, N, Cin), jnp.float32)
    p = jax.random.normal(kp, (B, N, 3), jnp.float32)

    # Conv1d(Cin, Cout, kernel_size=1, bias=False): weight (Cout, Cin, 1);
    # used here as x @ W^T  -> pass W^T of shape (Cin, Cout).
    w = jax.random.normal(kw, (Cout, Cin), jnp.float32) / jnp.sqrt(Cin)
    w_mat = w.T

    # BatchNorm1d(Cout) eval-mode with default init (gamma=1, beta=0,
    # running_mean=0, running_var=1, eps=1e-5) folded into scale/bias.
    eps = 1e-5
    gamma = jnp.ones((Cout,), jnp.float32)
    beta = jnp.zeros((Cout,), jnp.float32)
    run_mean = jnp.zeros((Cout,), jnp.float32)
    run_var = jnp.ones((Cout,), jnp.float32)
    scale = gamma / jnp.sqrt(run_var + eps)
    bn_scale = scale.reshape(1, Cout)
    bn_bias = (beta - run_mean * scale).reshape(1, Cout)

    y_max, p_out = transition_down(x, p, w_mat, bn_scale, bn_bias,
                                   k=k, sampling_ratio=sampling_ratio,
                                   local_max_pooling=True)
    y_mean, _ = transition_down(x, p, w_mat, bn_scale, bn_bias,
                                k=k, sampling_ratio=sampling_ratio,
                                local_max_pooling=False)
    jax.block_until_ready((y_max, y_mean, p_out))

    # shape / dtype / ReLU checks
    assert y_max.shape == (B, M, Cout) and y_max.dtype == jnp.float32
    assert y_mean.shape == (B, M, Cout) and y_mean.dtype == jnp.float32
    assert p_out.shape == (B, M, 3) and p_out.dtype == jnp.float32
    assert bool(jnp.all(jnp.isfinite(y_max))) and bool(jnp.all(y_max >= 0.0))
    assert bool(jnp.all(jnp.isfinite(y_mean))) and bool(jnp.all(y_mean >= 0.0))

    # FPS sanity: start point is p[:, 0]; every sampled point is a member of
    # the original cloud (coordinates copied bit-exactly); samples are distinct.
    assert bool(jnp.all(p_out[:, 0, :] == p[:, 0, :]))
    d_member = jnp.min(
        jnp.sum((p_out[:, :, None, :] - p[:, None, :, :]) ** 2, axis=-1), axis=-1)
    assert bool(jnp.all(d_member == 0.0))
    d_self = jnp.sum((p_out[:, :, None, :] - p_out[:, None, :, :]) ** 2, axis=-1)
    d_self = d_self + jnp.eye(M, dtype=jnp.float32)[None] * 1e9
    assert bool(jnp.all(d_self > 0.0))

    print("KERNEL_OK")
</pallas_src>

<mosaic_0001>
module attributes {stable_mosaic.version = 11 : i64} {
  func.func @_fused_transition_down_kernel(%arg0: i32, %arg1: memref<384xf32, #tpu.memory_space<smem>>, %arg2: memref<1x64x3xf32, #tpu.memory_space<vmem>>, %arg3: memref<1x3x64xf32, #tpu.memory_space<vmem>>, %arg4: memref<1x64x16xf32, #tpu.memory_space<vmem>>, %arg5: memref<16x128xf32, #tpu.memory_space<vmem>>, %arg6: memref<1x128xf32, #tpu.memory_space<vmem>>, %arg7: memref<1x128xf32, #tpu.memory_space<vmem>>, %arg8: memref<1x16x128xf32, #tpu.memory_space<vmem>>, %arg9: memref<1x16x3xf32, #tpu.memory_space<vmem>>, %arg10: memref<16x64xf32, #tpu.memory_space<vmem>>, %arg11: memref<64x128xbf16, #tpu.memory_space<vmem>>, %arg12: memref<16x128xf32, #tpu.memory_space<vmem>>) attributes {dimension_semantics = [#tpu.dimension_semantics<parallel>], iteration_bounds = array<i64: 2>, scalar_prefetch = 1 : i64, scratch_operands = 3 : i64, tpu.core_type = #tpu.core_type<tc>, window_params = [{transform_indices = @transform_0, window_bounds = array<i64: 1, 64, 3>}, {transform_indices = @transform_1, window_bounds = array<i64: 1, 3, 64>}, {transform_indices = @transform_2, window_bounds = array<i64: 1, 64, 16>}, {pipeline_mode = #tpu.pipeline_mode<synchronous>, transform_indices = @transform_3, window_bounds = array<i64: 16, 128>}, {pipeline_mode = #tpu.pipeline_mode<synchronous>, transform_indices = @transform_4, window_bounds = array<i64: 1, 128>}, {pipeline_mode = #tpu.pipeline_mode<synchronous>, transform_indices = @transform_5, window_bounds = array<i64: 1, 128>}, {transform_indices = @transform_6, window_bounds = array<i64: 1, 16, 128>}, {transform_indices = @transform_7, window_bounds = array<i64: 1, 16, 3>}]} {
    %c192_i32 = arith.constant 192 : i32
    %0 = arith.muli %arg0, %c192_i32 : i32
    %c0 = arith.constant 0 : index
    %c0_0 = arith.constant 0 : index
    %c0_1 = arith.constant 0 : index
    %1 = vector.load %arg4[%c0, %c0_0, %c0_1] : memref<1x64x16xf32, #tpu.memory_space<vmem>>, vector<1x64x16xf32>
    %2 = vector.shape_cast %1 : vector<1x64x16xf32> to vector<64x16xf32>
    %c0_2 = arith.constant 0 : index
    %c0_3 = arith.constant 0 : index
    %3 = vector.load %arg5[%c0_2, %c0_3] : memref<16x128xf32, #tpu.memory_space<vmem>>, vector<16x128xf32>
    %cst = arith.constant dense<0.000000e+00> : vector<64x128xf32>
    %4 = tpu.matmul %2, %3, %cst {dimension_numbers = #tpu.dot_dimension_numbers<[1], [0], [0], [1], [0, 0, 1, 1], [], []>} : vector<64x16xf32>, vector<16x128xf32>, vector<64x128xf32> -> vector<64x128xf32>
    %c0_4 = arith.constant 0 : index
    %c0_5 = arith.constant 0 : index
    %5 = vector.load %arg6[%c0_4, %c0_5] : memref<1x128xf32, #tpu.memory_space<vmem>>, vector<1x128xf32>
    %6 = vector.broadcast %5 : vector<1x128xf32> to vector<64x128xf32>
    %7 = arith.mulf %4, %6 : vector<64x128xf32>
    %c0_6 = arith.constant 0 : index
    %c0_7 = arith.constant 0 : index
    %8 = vector.load %arg7[%c0_6, %c0_7] : memref<1x128xf32, #tpu.memory_space<vmem>>, vector<1x128xf32>
    %9 = vector.broadcast %8 : vector<1x128xf32> to vector<64x128xf32>
    %10 = arith.addf %7, %9 : vector<64x128xf32>
    %cst_8 = arith.constant 0.000000e+00 : f32
    %11 = vector.broadcast %cst_8 : f32 to vector<64x128xf32>
    %12 = arith.maximumf %10, %11 : vector<64x128xf32>
    %13 = arith.truncf %12 : vector<64x128xf32> to vector<64x128xbf16>
    %c0_9 = arith.constant 0 : index
    %c0_10 = arith.constant 0 : index
    %14 = vector.load %arg11[%c0_9, %c0_10] : memref<64x128xbf16, #tpu.memory_space<vmem>>, vector<64x128xbf16>
    tpu.vector_store %arg11[%c0_9, %c0_10], %13 {strides = array<i32>} : memref<64x128xbf16, #tpu.memory_space<vmem>>, vector<64x128xbf16>,
    %c0_11 = arith.constant 0 : index
    %c0_12 = arith.constant 0 : index
    %c0_13 = arith.constant 0 : index
    %15 = vector.load %arg3[%c0_11, %c0_12, %c0_13] : memref<1x3x64xf32, #tpu.memory_space<vmem>>, vector<1x3x64xf32>
    %16 = vector.shape_cast %15 : vector<1x3x64xf32> to vector<3x64xf32>
    %17 = vector.extract_strided_slice %16 {offsets = [0, 0], sizes = [1, 64], strides = [1, 1]} : vector<3x64xf32> to vector<1x64xf32>
    %18 = vector.extract_strided_slice %16 {offsets = [1, 0], sizes = [1, 64], strides = [1, 1]} : vector<3x64xf32> to vector<1x64xf32>
    %19 = vector.extract_strided_slice %16 {offsets = [2, 0], sizes = [1, 64], strides = [1, 1]} : vector<3x64xf32> to vector<1x64xf32>
    %20 = arith.mulf %17, %17 : vector<1x64xf32>
    %21 = arith.mulf %18, %18 : vector<1x64xf32>
    %22 = arith.addf %20, %21 : vector<1x64xf32>
    %23 = arith.mulf %19, %19 : vector<1x64xf32>
    %24 = arith.addf %22, %23 : vector<1x64xf32>
    %cst_14 = arith.constant 0x7F800000 : f32
    %25 = vector.broadcast %cst_14 : f32 to vector<1x64xf32>
    %c0_i32 = arith.constant 0 : i32
    %c0_i32_15 = arith.constant 0 : i32
    %c16_i32 = arith.constant 16 : i32
    %26 = arith.addi %c0_i32_15, %c16_i32 : i32
    %c1_i32 = arith.constant 1 : i32
    %27:2 = scf.for %arg13 = %c0_i32_15 to %26 step %c1_i32 iter_args(%arg14 = %c0_i32, %arg15 = %25) -> (i32, vector<1x64xf32>)  : i32 {
      %c0_29 = arith.constant 0 : index
      %36 = arith.index_cast %arg14 : i32 to index
      %c0_30 = arith.constant 0 : index
      %37 = vector.load %arg2[%c0_29, %36, %c0_30] : memref<1x64x3xf32, #tpu.memory_space<vmem>>, vector<1x1x3xf32>
      %38 = vector.shape_cast %37 : vector<1x1x3xf32> to vector<1x3xf32>
      %c0_31 = arith.constant 0 : index
      %39 = arith.index_cast %arg13 : i32 to index
      %c0_32 = arith.constant 0 : index
      %40 = vector.load %arg9[%c0_31, %39, %c0_32] : memref<1x16x3xf32, #tpu.memory_space<vmem>>, vector<1x1x3xf32>
      %41 = vector.shape_cast %40 : vector<1x1x3xf32> to vector<1x3xf32>
      %42 = vector.shape_cast %38 : vector<1x3xf32> to vector<1x1x3xf32>
      tpu.vector_store %arg9[%c0_31, %39, %c0_32], %42 {strides = array<i32>} : memref<1x16x3xf32, #tpu.memory_space<vmem>>, vector<1x1x3xf32>,
      %43 = arith.addi %0, %arg14 : i32
      %44 = arith.index_cast %43 : i32 to index
      %45 = memref.load %arg1[%44] : memref<384xf32, #tpu.memory_space<smem>>
      %c64_i32 = arith.constant 64 : i32
      %46 = arith.addi %0, %c64_i32 : i32
      %47 = arith.addi %46, %arg14 : i32
      %48 = arith.index_cast %47 : i32 to index
      %49 = memref.load %arg1[%48] : memref<384xf32, #tpu.memory_space<smem>>
      %c128_i32 = arith.constant 128 : i32
      %50 = arith.addi %0, %c128_i32 : i32
      %51 = arith.addi %50, %arg14 : i32
      %52 = arith.index_cast %51 : i32 to index
      %53 = memref.load %arg1[%52] : memref<384xf32, #tpu.memory_space<smem>>
      %54 = arith.mulf %45, %45 : f32
      %55 = arith.mulf %49, %49 : f32
      %56 = arith.addf %54, %55 : f32
      %57 = arith.mulf %53, %53 : f32
      %58 = arith.addf %56, %57 : f32
      %59 = vector.broadcast %58 : f32 to vector<1x64xf32>
      %60 = arith.addf %24, %59 : vector<1x64xf32>
      %61 = vector.broadcast %45 : f32 to vector<1x64xf32>
      %62 = arith.mulf %61, %17 : vector<1x64xf32>
      %63 = vector.broadcast %49 : f32 to vector<1x64xf32>
      %64 = arith.mulf %63, %18 : vector<1x64xf32>
      %65 = arith.addf %62, %64 : vector<1x64xf32>
      %66 = vector.broadcast %53 : f32 to vector<1x64xf32>
      %67 = arith.mulf %66, %19 : vector<1x64xf32>
      %68 = arith.addf %65, %67 : vector<1x64xf32>
      %cst_33 = arith.constant 2.000000e+00 : f32
      %69 = vector.broadcast %cst_33 : f32 to vector<1x64xf32>
      %70 = arith.mulf %69, %68 : vector<1x64xf32>
      %71 = arith.subf %60, %70 : vector<1x64xf32>
      %cst_34 = arith.constant 0.000000e+00 : f32
      %72 = vector.broadcast %cst_34 : f32 to vector<1x64xf32>
      %73 = arith.maximumf %71, %72 : vector<1x64xf32>
      %74 = arith.index_cast %arg13 : i32 to index
      %c0_35 = arith.constant 0 : index
      %75 = vector.load %arg10[%74, %c0_35] : memref<16x64xf32, #tpu.memory_space<vmem>>, vector<1x64xf32>
      tpu.vector_store %arg10[%74, %c0_35], %73 {strides = array<i32>} : memref<16x64xf32, #tpu.memory_space<vmem>>, vector<1x64xf32>,
      %76 = arith.minimumf %arg15, %73 : vector<1x64xf32>
      %77 = tpu.reduce_index %76 {axis = 1 : i32, kind = #tpu.reduction_kind<arg_max>} : vector<1x64xf32> -> vector<1xi32>
      %78 = vector.extract %77[0] : i32 from vector<1xi32>
      scf.yield %78, %76 : i32, vector<1x64xf32>
    }
    %c16_i32_16 = arith.constant 16 : i32
    %28 = tpu.iota {dimensions = array<i32: 1>} : vector<16x64xi32>
    %cst_17 = arith.constant 0xFF800000 : f32
    %29 = vector.broadcast %cst_17 : f32 to vector<16x128xf32>
    %c0_18 = arith.constant 0 : index
    %c0_19 = arith.constant 0 : index
    %30 = vector.load %arg12[%c0_18, %c0_19] : memref<16x128xf32, #tpu.memory_space<vmem>>, vector<16x128xf32>
    tpu.vector_store %arg12[%c0_18, %c0_19], %29 {strides = array<i32>} : memref<16x128xf32, #tpu.memory_space<vmem>>, vector<16x128xf32>,
    %cst_20 = arith.constant 1.000000e+30 : f32
    %c0_i32_21 = arith.constant 0 : i32
    %c16_i32_22 = arith.constant 16 : i32
    %31 = arith.addi %c0_i32_21, %c16_i32_22 : i32
    %c1_i32_23 = arith.constant 1 : i32
    scf.for %arg13 = %c0_i32_21 to %31 step %c1_i32_23  : i32 {
      %c0_29 = arith.constant 0 : index
      %c0_30 = arith.constant 0 : index
      %36 = vector.load %arg10[%c0_29, %c0_30] : memref<16x64xf32, #tpu.memory_space<vmem>>, vector<16x64xf32>
      %37 = tpu.reduce_index %36 {axis = 1 : i32, kind = #tpu.reduction_kind<arg_min>} : vector<16x64xf32> -> vector<16xi32>
      %38 = vector.shape_cast %37 : vector<16xi32> to vector<16x1xi32>
      %39 = vector.broadcast %38 : vector<16x1xi32> to vector<16x64xi32>
      %40 = arith.cmpi eq, %28, %39 : vector<16x64xi32>
      %41 = arith.extui %40 : vector<16x64xi1> to vector<16x64xi32>
      %42 = arith.sitofp %41 : vector<16x64xi32> to vector<16x64xf32>
      %43 = arith.truncf %42 : vector<16x64xf32> to vector<16x64xbf16>
      %c0_31 = arith.constant 0 : index
      %c0_32 = arith.constant 0 : index
      %44 = vector.load %arg11[%c0_31, %c0_32] : memref<64x128xbf16, #tpu.memory_space<vmem>>, vector<64x128xbf16>
      %cst_33 = arith.constant dense<0.000000e+00> : vector<16x128xf32>
      %45 = tpu.matmul %43, %44, %cst_33 {dimension_numbers = #tpu.dot_dimension_numbers<[1], [0], [0], [1], [0, 0, 1, 1], [], []>} : vector<16x64xbf16>, vector<64x128xbf16>, vector<16x128xf32> -> vector<16x128xf32>
      %c0_34 = arith.constant 0 : index
      %c0_35 = arith.constant 0 : index
      %46 = vector.load %arg12[%c0_34, %c0_35] : memref<16x128xf32, #tpu.memory_space<vmem>>, vector<16x128xf32>
      %47 = arith.maximumf %46, %45 : vector<16x128xf32>
      %c0_36 = arith.constant 0 : index
      %c0_37 = arith.constant 0 : index
      %48 = vector.load %arg12[%c0_36, %c0_37] : memref<16x128xf32, #tpu.memory_space<vmem>>, vector<16x128xf32>
      tpu.vector_store %arg12[%c0_36, %c0_37], %47 {strides = array<i32>} : memref<16x128xf32, #tpu.memory_space<vmem>>, vector<16x128xf32>,
      %49 = arith.extui %40 : vector<16x64xi1> to vector<16x64xi32>
      %50 = arith.sitofp %49 : vector<16x64xi32> to vector<16x64xf32>
      %51 = vector.broadcast %cst_20 : f32 to vector<16x64xf32>
      %52 = arith.mulf %50, %51 : vector<16x64xf32>
      %53 = arith.addf %36, %52 : vector<16x64xf32>
      %c0_38 = arith.constant 0 : index
      %c0_39 = arith.constant 0 : index
      %54 = vector.load %arg10[%c0_38, %c0_39] : memref<16x64xf32, #tpu.memory_space<vmem>>, vector<16x64xf32>
      tpu.vector_store %arg10[%c0_38, %c0_39], %53 {strides = array<i32>} : memref<16x64xf32, #tpu.memory_space<vmem>>, vector<16x64xf32>,
    }
    %c0_24 = arith.constant 0 : index
    %c0_25 = arith.constant 0 : index
    %32 = vector.load %arg12[%c0_24, %c0_25] : memref<16x128xf32, #tpu.memory_space<vmem>>, vector<16x128xf32>
    %c0_26 = arith.constant 0 : index
    %c0_27 = arith.constant 0 : index
    %c0_28 = arith.constant 0 : index
    %33 = vector.load %arg8[%c0_26, %c0_27, %c0_28] : memref<1x16x128xf32, #tpu.memory_space<vmem>>, vector<1x16x128xf32>
    %34 = vector.shape_cast %33 : vector<1x16x128xf32> to vector<16x128xf32>
    %35 = vector.shape_cast %32 : vector<16x128xf32> to vector<1x16x128xf32>
    tpu.vector_store %arg8[%c0_26, %c0_27, %c0_28], %35 {strides = array<i32>} : memref<1x16x128xf32, #tpu.memory_space<vmem>>, vector<1x16x128xf32>,
    return
  }
  func.func @transform_0(%arg0: i32, %arg1: memref<384xf32, #tpu.memory_space<smem>>) -> (i32, i32, i32) {
    %c0_i32 = arith.constant 0 : i32
    %c0_i32_0 = arith.constant 0 : i32
    %c0_i32_1 = arith.constant 0 : i32
    return %arg0, %c0_i32, %c0_i32_0 : i32, i32, i32
  }
  func.func @transform_1(%arg0: i32, %arg1: memref<384xf32, #tpu.memory_space<smem>>) -> (i32, i32, i32) {
    %c0_i32 = arith.constant 0 : i32
    %c0_i32_0 = arith.constant 0 : i32
    %c0_i32_1 = arith.constant 0 : i32
    return %arg0, %c0_i32, %c0_i32_0 : i32, i32, i32
  }
  func.func @transform_2(%arg0: i32, %arg1: memref<384xf32, #tpu.memory_space<smem>>) -> (i32, i32, i32) {
    %c0_i32 = arith.constant 0 : i32
    %c0_i32_0 = arith.constant 0 : i32
    %c0_i32_1 = arith.constant 0 : i32
    return %arg0, %c0_i32, %c0_i32_0 : i32, i32, i32
  }
  func.func @transform_3(%arg0: i32, %arg1: memref<384xf32, #tpu.memory_space<smem>>) -> (i32, i32) {
    %c0_i32 = arith.constant 0 : i32
    %c0_i32_0 = arith.constant 0 : i32
    %c0_i32_1 = arith.constant 0 : i32
    return %c0_i32, %c0_i32_0 : i32, i32
  }
  func.func @transform_4(%arg0: i32, %arg1: memref<384xf32, #tpu.memory_space<smem>>) -> (i32, i32) {
    %c0_i32 = arith.constant 0 : i32
    %c0_i32_0 = arith.constant 0 : i32
    %c0_i32_1 = arith.constant 0 : i32
    return %c0_i32, %c0_i32_0 : i32, i32
  }
  func.func @transform_5(%arg0: i32, %arg1: memref<384xf32, #tpu.memory_space<smem>>) -> (i32, i32) {
    %c0_i32 = arith.constant 0 : i32
    %c0_i32_0 = arith.constant 0 : i32
    %c0_i32_1 = arith.constant 0 : i32
    return %c0_i32, %c0_i32_0 : i32, i32
  }
  func.func @transform_6(%arg0: i32, %arg1: memref<384xf32, #tpu.memory_space<smem>>) -> (i32, i32, i32) {
    %c0_i32 = arith.constant 0 : i32
    %c0_i32_0 = arith.constant 0 : i32
    %c0_i32_1 = arith.constant 0 : i32
    return %arg0, %c0_i32, %c0_i32_0 : i32, i32, i32
  }
  func.func @transform_7(%arg0: i32, %arg1: memref<384xf32, #tpu.memory_space<smem>>) -> (i32, i32, i32) {
    %c0_i32 = arith.constant 0 : i32
    %c0_i32_0 = arith.constant 0 : i32
    %c0_i32_1 = arith.constant 0 : i32
    return %arg0, %c0_i32, %c0_i32_0 : i32, i32, i32
  }
}

</mosaic_0001>

<llo_original>
// kernel: tpu_custom_call.1
$region0: #{tpu_custom_call.1}
  #allocation0 [shape = 'u32[]', space=smem, size = 0x4, offset = 0x4, fixed_abs, tag = 'smem constant byte address 0x4 - core index']
  #allocation1 [shape = 'u32[144,128]{1,0:T(1,128)}', space=vmem, size = 0x12000, scoped, tag = 'internal scratch']
  #allocation2 [shape = 'f32[16,64]{1,0:T(8,128)}', space=vmem, size = 0x2000, scoped, tag = 'scratch operand']
  #allocation3 [shape = 'bf16[64,128]{1,0:T(8,128)(2,1)}', space=vmem, size = 0x4000, scoped, tag = 'scratch operand']
  #allocation4 [shape = 'f32[16,128]{1,0:T(8,128)}', space=vmem, size = 0x2000, scoped, tag = 'scratch operand']
  #allocation5 [shape = 's32[1]{0}', space=sflag, size = 0x4, scoped, tag = 'scoped memory for tpu_custom_call.1']
  #allocation6 [shape = 'u8[1536]{0}', space=smem, size = 0x600, scoped, tag = 'prefetched SMEM operand 0']
  %s0 = inlined_call_operand.vmem [shape: f32[384], index: 0, kind: input, shape index: {}]
  %s1 = inlined_call_operand.vmem [shape: f32[2,64,3], index: 1, kind: input, shape index: {}]
  %s2 = inlined_call_operand.vmem [shape: f32[2,3,64], index: 2, kind: input, shape index: {}]
  %s3 = inlined_call_operand.vmem [shape: f32[2,64,16], index: 3, kind: input, shape index: {}]
  %s4 = inlined_call_operand.vmem [shape: f32[16,128], index: 4, kind: input, shape index: {}]
  %s5 = inlined_call_operand.vmem [shape: f32[1,128], index: 5, kind: input, shape index: {}]
  %s6 = inlined_call_operand.vmem [shape: f32[1,128], index: 6, kind: input, shape index: {}]
  %s7 = inlined_call_operand.hbm [shape: f32[2,16,128], index: 7, kind: output, shape index: {0}]
  %s8 = inlined_call_operand.vmem [shape: f32[2,16,3], index: 8, kind: output, shape index: {1}]
  %9 = xla_tuple %s7, %s8
  %s10 = sld [smem:[#allocation0]]
  $region79: #{tpu_custom_call.1} parent=0
    _
  %s12 = ssub.s32 1, %s10
  %s13 = scalar_select 0, %s12, %s10
  %s14 = sshll.u32 %s0, 4
  %s15 = int_to_ptr.vmem [resolvable:$true] %s14
  %17 = dma.vmem_to_smem %s15, 48, [#allocation6], [#allocation5]
  %18 = dma.done [#allocation5], 48
  %19 = sfence
  $region1: #{tpu_custom_call.1} parent=0
    #allocation7 [shape = 'u8[16384]{0}', space=vmem, size = 0x4000, scoped, tag = 'output window, operand 0']
    #allocation8 [shape = 's32[2]{0}', space=sflag, size = 0x8, scoped, tag = 'scoped memory for tpu_custom_call.1']
    %20 = vsyncpa [#allocation8], 0
    %s21 = scalar_lea.sflag [#allocation8], 1
    %22 = vsyncpa %s21, 0
    loop: start=0, step=1, limit=4
    $region2: #{tpu_custom_call.1} parent=1 // loop_pre_header
      _
    $region3: #{tpu_custom_call.1} parent=1 // loop_header
      %s24 = sphi 0, %s28
      %p25 = scmp.ge.s32.totalorder %s24, 4
      %s34 = sphi 0, %s36
      %s37 = sphi 0, %s34
      %s38 = sphi 0, %s37
      %s54 = sphi 0, %s38
      %s60 = sphi 0, %s62
      %s63 = sphi 0, %s60
      %s64 = sphi 0, %s63
      %s80 = sphi 0, %s64
      %s86 = sphi 0, %s88
      %s89 = sphi 0, %s86
      %s90 = sphi 0, %s89
      %s106 = sphi 0, %s90
      %s110 = sphi 0, %s110
      %s112 = sphi 0, %s110
      %s113 = sphi 0, %s112
      %s127 = sphi 0, %s113
      %s131 = sphi 0, %s131
      %s133 = sphi 0, %s131
      %s134 = sphi 0, %s133
      %s148 = sphi 0, %s134
      %s152 = sphi 0, %s152
      %s154 = sphi 0, %s152
      %s155 = sphi 0, %s154
      %s169 = sphi 0, %s155
      %s175 = sphi 0, %s177
      %s178 = sphi 0, %s175
      %s179 = sphi 0, %s178
      %s195 = sphi 0, %s179
      %s201 = sphi 0, %s203
      %s204 = sphi 0, %s201
      %s205 = sphi 0, %s204
      %s221 = sphi 0, %s205
    $region4: #{tpu_custom_call.1} parent=1 // loop_header_branch
      %27 = sbr.rel (%p25) target = $region8
    $region5: #{tpu_custom_call.1} parent=1 // loop_body
      %s29 = ssub.s32 %s24, 1
      %s30 = ssub.s32 %s24, 2
      %s31 = sadd.s32 %s24, 1
      %s32 = ssub.s32 %s24, %s31
      %p33 = scmp.eq.s32.totalorder %s32, 0
      %s35 = sadd.s32 %s34, 1
      %s36 = scalar_select %p33, %s34, %s35
      %p39 = pneg %p33
      %p40 = scmp.eq.s32.totalorder %s24, 1
      %p41 = por %p39, %p40
      %p42 = scmp.ne.s32.totalorder %s34, %s37
      %p43 = scmp.eq.s32.totalorder %s24, 0
      %p44 = por %p42, %p43
      %p45 = scmp.ne.s32.totalorder %s34, %s37
      %p46 = scmp.eq.s32.totalorder %s29, 1
      %p47 = por %p45, %p46
      %p48 = scmp.ne.s32.totalorder %s37, %s38
      %p49 = scmp.eq.s32.totalorder %s29, 0
      %p50 = por %p48, %p49
      %p51 = scmp.ne.s32.totalorder %s37, %s38
      %p52 = scmp.eq.s32.totalorder %s30, 1
      %p53 = por %p51, %p52
      %p55 = scmp.ne.s32.totalorder %s38, %s54
      %p56 = scmp.eq.s32.totalorder %s30, 0
      %p57 = por %p55, %p56
      %s58 = ssub.s32 %s24, %s31
      %p59 = scmp.eq.s32.totalorder %s58, 0
      %s61 = sadd.s32 %s60, 1
      %s62 = scalar_select %p59, %s60, %s61
      %p65 = pneg %p59
      %p66 = scmp.eq.s32.totalorder %s24, 1
      %p67 = por %p65, %p66
      %p68 = scmp.ne.s32.totalorder %s60, %s63
      %p69 = scmp.eq.s32.totalorder %s24, 0
      %p70 = por %p68, %p69
      %p71 = scmp.ne.s32.totalorder %s60, %s63
      %p72 = scmp.eq.s32.totalorder %s29, 1
      %p73 = por %p71, %p72
      %p74 = scmp.ne.s32.totalorder %s63, %s64
      %p75 = scmp.eq.s32.totalorder %s29, 0
      %p76 = por %p74, %p75
      %p77 = scmp.ne.s32.totalorder %s63, %s64
      %p78 = scmp.eq.s32.totalorder %s30, 1
      %p79 = por %p77, %p78
      %p81 = scmp.ne.s32.totalorder %s64, %s80
      %p82 = scmp.eq.s32.totalorder %s30, 0
      %p83 = por %p81, %p82
      %s84 = ssub.s32 %s24, %s31
      %p85 = scmp.eq.s32.totalorder %s84, 0
      %s87 = sadd.s32 %s86, 1
      %s88 = scalar_select %p85, %s86, %s87
      %p91 = pneg %p85
      %p92 = scmp.eq.s32.totalorder %s24, 1
      %p93 = por %p91, %p92
      %p94 = scmp.ne.s32.totalorder %s86, %s89
      %p95 = scmp.eq.s32.totalorder %s24, 0
      %p96 = por %p94, %p95
      %p97 = scmp.ne.s32.totalorder %s86, %s89
      %p98 = scmp.eq.s32.totalorder %s29, 1
      %p99 = por %p97, %p98
      %p100 = scmp.ne.s32.totalorder %s89, %s90
      %p101 = scmp.eq.s32.totalorder %s29, 0
      %p102 = por %p100, %p101
      %p103 = scmp.ne.s32.totalorder %s89, %s90
      %p104 = scmp.eq.s32.totalorder %s30, 1
      %p105 = por %p103, %p104
      %p107 = scmp.ne.s32.totalorder %s90, %s106
      %p108 = scmp.eq.s32.totalorder %s30, 0
      %p109 = por %p107, %p108
      %s111 = sadd.s32 %s110, 1
      %p114 = scmp.eq.s32.totalorder %s24, 1
      %p115 = scmp.ne.s32.totalorder %s110, %s112
      %p116 = scmp.eq.s32.totalorder %s24, 0
      %p117 = por %p115, %p116
      %p118 = scmp.ne.s32.totalorder %s110, %s112
      %p119 = scmp.eq.s32.totalorder %s29, 1
      %p120 = por %p118, %p119
      %p121 = scmp.ne.s32.totalorder %s112, %s113
      %p122 = scmp.eq.s32.totalorder %s29, 0
      %p123 = por %p121, %p122
      %p124 = scmp.ne.s32.totalorder %s112, %s113
      %p125 = scmp.eq.s32.totalorder %s30, 1
      %p126 = por %p124, %p125
      %p128 = scmp.ne.s32.totalorder %s113, %s127
      %p129 = scmp.eq.s32.totalorder %s30, 0
      %p130 = por %p128, %p129
      %s132 = sadd.s32 %s131, 1
      %p135 = scmp.eq.s32.totalorder %s24, 1
      %p136 = scmp.ne.s32.totalorder %s131, %s133
      %p137 = scmp.eq.s32.totalorder %s24, 0
      %p138 = por %p136, %p137
      %p139 = scmp.ne.s32.totalorder %s131, %s133
      %p140 = scmp.eq.s32.totalorder %s29, 1
      %p141 = por %p139, %p140
      %p142 = scmp.ne.s32.totalorder %s133, %s134
      %p143 = scmp.eq.s32.totalorder %s29, 0
      %p144 = por %p142, %p143
      %p145 = scmp.ne.s32.totalorder %s133, %s134
      %p146 = scmp.eq.s32.totalorder %s30, 1
      %p147 = por %p145, %p146
      %p149 = scmp.ne.s32.totalorder %s134, %s148
      %p150 = scmp.eq.s32.totalorder %s30, 0
      %p151 = por %p149, %p150
      %s153 = sadd.s32 %s152, 1
      %p156 = scmp.eq.s32.totalorder %s24, 1
      %p157 = scmp.ne.s32.totalorder %s152, %s154
      %p158 = scmp.eq.s32.totalorder %s24, 0
      %p159 = por %p157, %p158
      %p160 = scmp.ne.s32.totalorder %s152, %s154
      %p161 = scmp.eq.s32.totalorder %s29, 1
      %p162 = por %p160, %p161
      %p163 = scmp.ne.s32.totalorder %s154, %s155
      %p164 = scmp.eq.s32.totalorder %s29, 0
      %p165 = por %p163, %p164
      %p166 = scmp.ne.s32.totalorder %s154, %s155
      %p167 = scmp.eq.s32.totalorder %s30, 1
      %p168 = por %p166, %p167
      %p170 = scmp.ne.s32.totalorder %s155, %s169
      %p171 = scmp.eq.s32.totalorder %s30, 0
      %p172 = por %p170, %p171
      %s173 = ssub.s32 %s24, %s31
      %p174 = scmp.eq.s32.totalorder %s173, 0
      %s176 = sadd.s32 %s175, 1
      %s177 = scalar_select %p174, %s175, %s176
      %p180 = pneg %p174
      %p181 = scmp.eq.s32.totalorder %s24, 1
      %p182 = por %p180, %p181
      %p183 = scmp.ne.s32.totalorder %s175, %s178
      %p184 = scmp.eq.s32.totalorder %s24, 0
      %p185 = por %p183, %p184
      %p186 = scmp.ne.s32.totalorder %s175, %s178
      %p187 = scmp.eq.s32.totalorder %s29, 1
      %p188 = por %p186, %p187
      %p189 = scmp.ne.s32.totalorder %s178, %s179
      %p190 = scmp.eq.s32.totalorder %s29, 0
      %p191 = por %p189, %p190
      %p192 = scmp.ne.s32.totalorder %s178, %s179
      %p193 = scmp.eq.s32.totalorder %s30, 1
      %p194 = por %p192, %p193
      %p196 = scmp.ne.s32.totalorder %s179, %s195
      %p197 = scmp.eq.s32.totalorder %s30, 0
      %p198 = por %p196, %p197
      %s199 = ssub.s32 %s24, %s31
      %p200 = scmp.eq.s32.totalorder %s199, 0
      %s202 = sadd.s32 %s201, 1
      %s203 = scalar_select %p200, %s201, %s202
      %p206 = pneg %p200
      %p207 = scmp.eq.s32.totalorder %s24, 1
      %p208 = por %p206, %p207
      %p209 = scmp.ne.s32.totalorder %s201, %s204
      %p210 = scmp.eq.s32.totalorder %s24, 0
      %p211 = por %p209, %p210
      %p212 = scmp.ne.s32.totalorder %s201, %s204
      %p213 = scmp.eq.s32.totalorder %s29, 1
      %p214 = por %p212, %p213
      %p215 = scmp.ne.s32.totalorder %s204, %s205
      %p216 = scmp.eq.s32.totalorder %s29, 0
      %p217 = por %p215, %p216
      %p218 = scmp.ne.s32.totalorder %s204, %s205
      %p219 = scmp.eq.s32.totalorder %s30, 1
      %p220 = por %p218, %p219
      %p222 = scmp.ne.s32.totalorder %s205, %s221
      %p223 = scmp.eq.s32.totalorder %s30, 0
      %p224 = por %p222, %p223
      %p225 = scmp.le.s32.totalorder 1, %s24
      %p226 = scmp.lt.s32.totalorder %s24, 3
      %p227 = pnand %p225, %p226
      %p228 = pneg %p227
      // Predicated region
      $region9: #{tpu_custom_call.1} parent=5 // pred_check
        _
      $region10: #{tpu_custom_call.1} parent=5 // pred_check_branch
        %230 = sbr.rel (%p227) target = $region12
      $region11: #{tpu_custom_call.1} parent=5 // pred_region
        %s231 = ssub.s32 %s24, 1
        // Predicated region
        $region13: #{tpu_custom_call.1} parent=11 // pred_check
          %p232 = pneg %p123
        $region14: #{tpu_custom_call.1} parent=11 // pred_check_branch
          %234 = sbr.rel (%p232) target = $region16
        $region15: #{tpu_custom_call.1} parent=11 // pred_region
          _
        $region16: #{tpu_custom_call.1} parent=11 // pred_fallthru
          _
        // Predicated region
        $region17: #{tpu_custom_call.1} parent=11 // pred_check
          %p235 = pneg %p144
        $region18: #{tpu_custom_call.1} parent=11 // pred_check_branch
          %237 = sbr.rel (%p235) target = $region20
        $region19: #{tpu_custom_call.1} parent=11 // pred_region
          _
        $region20: #{tpu_custom_call.1} parent=11 // pred_fallthru
          _
        // Predicated region
        $region21: #{tpu_custom_call.1} parent=11 // pred_check
          %p238 = pneg %p165
        $region22: #{tpu_custom_call.1} parent=11 // pred_check_branch
          %240 = sbr.rel (%p238) target = $region24
        $region23: #{tpu_custom_call.1} parent=11 // pred_region
          _
        $region24: #{tpu_custom_call.1} parent=11 // pred_fallthru
          _
      $region12: #{tpu_custom_call.1} parent=5 // pred_fallthru
        _
      %p241 = scmp.lt.s32.totalorder %s24, 2
      // Predicated region
      $region25: #{tpu_custom_call.1} parent=5 // pred_check
        %p242 = pneg %p241
      $region26: #{tpu_custom_call.1} parent=5 // pred_check_branch
        %244 = sbr.rel (%p242) target = $region28
      $region27: #{tpu_custom_call.1} parent=5 // pred_region
        // Predicated region
        $region29: #{tpu_custom_call.1} parent=27 // pred_check
          %p245 = pneg %p44
        $region30: #{tpu_custom_call.1} parent=27 // pred_check_branch
          %247 = sbr.rel (%p245) target = $region32
        $region31: #{tpu_custom_call.1} parent=27 // pred_region
          %p248 = scmp.lt.s32.totalorder %s24, 1
          %s249 = scalar_select %p248, %s24, 1
          %s250 = smul.addr %s249, 8
          %s251 = smul.addr %s250, 8
          %s252 = scalar_lea.vmem %s1, %s251
        $region32: #{tpu_custom_call.1} parent=27 // pred_fallthru
          _
        // Predicated region
        $region33: #{tpu_custom_call.1} parent=27 // pred_check
          %p253 = pneg %p70
        $region34: #{tpu_custom_call.1} parent=27 // pred_check_branch
          %255 = sbr.rel (%p253) target = $region36
        $region35: #{tpu_custom_call.1} parent=27 // pred_region
          %p256 = scmp.lt.s32.totalorder %s24, 1
          %s257 = scalar_select %p256, %s24, 1
          %s258 = smul.addr %s257, 4
          %s259 = scalar_lea.vmem %s2, %s258
        $region36: #{tpu_custom_call.1} parent=27 // pred_fallthru
          _
        // Predicated region
        $region37: #{tpu_custom_call.1} parent=27 // pred_check
          %p260 = pneg %p96
        $region38: #{tpu_custom_call.1} parent=27 // pred_check_branch
          %262 = sbr.rel (%p260) target = $region40
        $region39: #{tpu_custom_call.1} parent=27 // pred_region
          %p263 = scmp.lt.s32.totalorder %s24, 1
          %s264 = scalar_select %p263, %s24, 1
          %s265 = smul.addr %s264, 8
          %s266 = smul.addr %s265, 8
          %s267 = scalar_lea.vmem %s3, %s266
        $region40: #{tpu_custom_call.1} parent=27 // pred_fallthru
          _
      $region28: #{tpu_custom_call.1} parent=5 // pred_fallthru
        _
      %p268 = scmp.le.s32.totalorder 1, %s24
      %p269 = scmp.lt.s32.totalorder %s24, 3
      %p270 = pnand %p268, %p269
      %p271 = pneg %p270
      // Predicated region
      $region41: #{tpu_custom_call.1} parent=5 // pred_check
        _
      $region42: #{tpu_custom_call.1} parent=5 // pred_check_branch
        %273 = sbr.rel (%p270) target = $region44
      $region43: #{tpu_custom_call.1} parent=5 // pred_region
        %s274 = ssub.s32 %s24, 1
        %p275 = scmp.lt.s32.totalorder %s29, 1
        %s276 = scalar_select %p275, %s29, 1
        %s277 = smul.addr %s276, 8
        %s278 = smul.addr %s277, 8
        %s279 = scalar_lea.vmem %s1, %s278
        %p280 = pneg %p50
        %p281 = pneg %p47
        %p282 = scmp.lt.s32.totalorder %s29, 1
        %s283 = scalar_select %p282, %s29, 1
        %s284 = smul.addr %s283, 4
        %s285 = scalar_lea.vmem %s2, %s284
        %p286 = pneg %p76
        %p287 = pneg %p73
        %p288 = scmp.lt.s32.totalorder %s29, 1
        %s289 = scalar_select %p288, %s29, 1
        %s290 = smul.addr %s289, 8
        %s291 = smul.addr %s290, 8
        %s292 = scalar_lea.vmem %s3, %s291
        %p293 = pneg %p102
        %p294 = pneg %p99
        %p295 = pneg %p123
        %p296 = pneg %p120
        %p297 = pneg %p144
        %p298 = pneg %p141
        %p299 = pneg %p165
        %p300 = pneg %p162
        %p301 = pneg %p191
        %p302 = pneg %p188
        %s303 = sand.u32 %s178, 1
        %s304 = scalar_lea.sflag [#allocation8], %s303
        %s305 = sand.u32 %s178, 1
        %s306 = smul.addr %s305, 16
        %s307 = scalar_lea.vmem [#allocation7], %s306
        %p308 = pneg %p217
        %p309 = pneg %p214
        %p310 = scmp.lt.s32.totalorder %s29, 1
        %s311 = scalar_select %p310, %s29, 1
        %s312 = smul.addr %s311, 2
        %s313 = smul.addr %s312, 8
        %s314 = scalar_lea.vmem %s8, %s313
        %p315 = scmp.lt.s32.totalorder %s29, 1
        %s316 = scalar_select %p315, %s29, 1
        %s317 = smul.addr %s316, 8
        %s318 = smul.addr %s317, 8
        %s319 = scalar_lea.vmem %s1, %s318
        %p320 = scmp.lt.s32.totalorder %s29, 1
        %s321 = scalar_select %p320, %s29, 1
        %s322 = smul.addr %s321, 4
        %s323 = scalar_lea.vmem %s2, %s322
        %p324 = scmp.lt.s32.totalorder %s29, 1
        %s325 = scalar_select %p324, %s29, 1
        %s326 = smul.addr %s325, 8
        %s327 = smul.addr %s326, 8
        %s328 = scalar_lea.vmem %s3, %s327
        %p329 = scmp.lt.s32.totalorder %s29, 1
        %s330 = scalar_select %p329, %s29, 1
        %s331 = smul.addr %s330, 2
        %s332 = smul.addr %s331, 8
        %s333 = scalar_lea.vmem %s8, %s332
        %s335 = smul.u32 %s29, 192
        %v336 = vld [vmem:[%s328] sm:$0xff]
        %v337 = vld [vmem:[%s328 + $0x8] sm:$0xff]
        %v338 = vld [vmem:[%s328 + $0x10] sm:$0xff]
        %v339 = vld [vmem:[%s328 + $0x18] sm:$0xff]
        %v340 = vld [vmem:[%s328 + $0x20] sm:$0xff]
        %v341 = vld [vmem:[%s328 + $0x28] sm:$0xff]
        %v342 = vld [vmem:[%s328 + $0x30] sm:$0xff]
        %v343 = vld [vmem:[%s328 + $0x38] sm:$0xff]
        %v344 = vld [vmem:[%s4] sm:$0xff]
        %v345 = vld [vmem:[%s4 + $0x8] sm:$0xff]
        %vm346 = vcmask 130048
        %v348 = vsel %vm346, %v336, 0
        %v351 = vsel %vm346, %v337, 0
        %v354 = vsel %vm346, %v338, 0
        %v357 = vsel %vm346, %v339, 0
        %v360 = vsel %vm346, %v340, 0
        %v363 = vsel %vm346, %v341, 0
        %v366 = vsel %vm346, %v342, 0
        %v369 = vsel %vm346, %v343, 0
        %371 = vmatprep.subr.mxu0 0.0
        %372 = vmatpush1.msra.mxu0 0.0
        %373 = vmatprep.subr.mxu0 0.0
        %374 = vmatpush1.msra.mxu0 0.0
        %375 = vmatprep.subr.mxu0 0.0
        %376 = vmatpush1.msra.mxu0 0.0
        %377 = vmatprep.subr.mxu0 0.0
        %378 = vmatpush1.msra.mxu0 0.0
        %379 = vmatprep.subr.mxu0 0.0
        %380 = vmatpush1.msra.mxu0 0.0
        %381 = vmatprep.subr.mxu0 0.0
        %382 = vmatpush1.msra.mxu0 0.0
        %383 = vmatprep.subr.mxu0 0.0
        %384 = vmatpush1.msra.mxu0 0.0
        %385 = vmatprep.subr.mxu0 0.0
        %386 = vmatpush1.msra.mxu0 0.0
        %387 = vmatprep.subr.mxu0 0.0
        %388 = vmatpush1.msra.mxu0 0.0
        %389 = vmatprep.subr.mxu0 0.0
        %390 = vmatpush1.msra.mxu0 0.0
        %391 = vmatprep.subr.mxu0 0.0
        %392 = vmatpush1.msra.mxu0 0.0
        %393 = vmatprep.subr.mxu0 0.0
        %394 = vmatpush1.msra.mxu0 0.0
        %395 = vmatprep.subr.mxu0 0.0
        %396 = vmatpush1.msra.mxu0 0.0
        %397 = vmatprep.subr.mxu0 0.0
        %398 = vmatpush1.msra.mxu0 0.0
        %399 = vmatprep.subr.mxu0 0.0
        %400 = vmatpush1.msra.mxu0 %v345
        %401 = vmatprep.subr.mxu0 0.0
        %402 = vmatpush1.msra.mxu0 %v344
        %403 = vmatprep.subr.mxu0 0.0
        %404 = vmatpush2.msra.mxu0 0.0
        %405 = vmatprep.subr.mxu0 0.0
        %406 = vmatpush2.msra.mxu0 0.0
        %407 = vmatprep.subr.mxu0 0.0
        %408 = vmatpush2.msra.mxu0 0.0
        %409 = vmatprep.subr.mxu0 0.0
        %410 = vmatpush2.msra.mxu0 0.0
        %411 = vmatprep.subr.mxu0 0.0
        %412 = vmatpush2.msra.mxu0 0.0
        %413 = vmatprep.subr.mxu0 0.0
        %414 = vmatpush2.msra.mxu0 0.0
        %415 = vmatprep.subr.mxu0 0.0
        %416 = vmatpush2.msra.mxu0 0.0
        %417 = vmatprep.subr.mxu0 0.0
        %418 = vmatpush2.msra.mxu0 0.0
        %419 = vmatprep.subr.mxu0 0.0
        %420 = vmatpush2.msra.mxu0 0.0
        %421 = vmatprep.subr.mxu0 0.0
        %422 = vmatpush2.msra.mxu0 0.0
        %423 = vmatprep.subr.mxu0 0.0
        %424 = vmatpush2.msra.mxu0 0.0
        %425 = vmatprep.subr.mxu0 0.0
        %426 = vmatpush2.msra.mxu0 0.0
        %427 = vmatprep.subr.mxu0 0.0
        %428 = vmatpush2.msra.mxu0 0.0
        %429 = vmatprep.subr.mxu0 0.0
        %430 = vmatpush2.msra.mxu0 0.0
        %431 = vmatprep.subr.mxu0 0.0
        %432 = vmatpush2.msra.mxu0 0.0
        %433 = vmatprep.subr.mxu0 0.0
        %434 = vmatpush2.msra.mxu0 0.0
        %435 = vmatprep.mubr.f32.mxu0 0.0
        %436 = vmatmul.mubr.f32.gmra.mxu0 %v348
        %v437 = vpop.f32.mrf.mxu0
        %v438 = vadd.f32 0.0, %v437
        %v439 = vpop.f32.mrf.mxu0
        %440 = vmatprep.mubr.f32.mxu0 0.0
        %441 = vmatmul.mubr.f32.gmra.mxu0 %v351
        %v442 = vpop.f32.mrf.mxu0
        %v443 = vadd.f32 0.0, %v442
        %v444 = vpop.f32.mrf.mxu0
        %445 = vmatprep.mubr.f32.mxu0 0.0
        %446 = vmatmul.mubr.f32.gmra.mxu0 %v354
        %v447 = vpop.f32.mrf.mxu0
        %v448 = vadd.f32 0.0, %v447
        %v449 = vpop.f32.mrf.mxu0
        %450 = vmatprep.mubr.f32.mxu0 0.0
        %451 = vmatmul.mubr.f32.gmra.mxu0 %v357
        %v452 = vpop.f32.mrf.mxu0
        %v453 = vadd.f32 0.0, %v452
        %v454 = vpop.f32.mrf.mxu0
        %455 = vmatprep.mubr.f32.mxu0 0.0
        %456 = vmatmul.mubr.f32.gmra.mxu0 %v360
        %v457 = vpop.f32.mrf.mxu0
        %v458 = vadd.f32 0.0, %v457
        %v459 = vpop.f32.mrf.mxu0
        %460 = vmatprep.mubr.f32.mxu0 0.0
        %461 = vmatmul.mubr.f32.gmra.mxu0 %v363
        %v462 = vpop.f32.mrf.mxu0
        %v463 = vadd.f32 0.0, %v462
        %v464 = vpop.f32.mrf.mxu0
        %465 = vmatprep.mubr.f32.mxu0 0.0
        %466 = vmatmul.mubr.f32.gmra.mxu0 %v366
        %v467 = vpop.f32.mrf.mxu0
        %v468 = vadd.f32 0.0, %v467
        %v469 = vpop.f32.mrf.mxu0
        %470 = vmatprep.mubr.f32.mxu0 0.0
        %471 = vmatmul.mubr.f32.gmra.mxu0 %v369
        %v472 = vpop.f32.mrf.mxu0
        %v473 = vadd.f32 0.0, %v472
        %v474 = vpop.f32.mrf.mxu0
        %475 = vdwg.mxu0
        %v476 = vld [vmem:[%s5] sm:$0x1]
        %v478 = vlaneseq
        %v479 = vshrl.u32 %v478, 7
        %v480 = vsub.s32 0, %v479
        %v481 = vrot.slane %v476, %v480
        %v483 = vmul.f32 %v438, %v481
        %v484 = vmul.f32 %v443, %v481
        %v485 = vmul.f32 %v448, %v481
        %v486 = vmul.f32 %v453, %v481
        %v487 = vmul.f32 %v458, %v481
        %v488 = vmul.f32 %v463, %v481
        %v489 = vmul.f32 %v468, %v481
        %v490 = vmul.f32 %v473, %v481
        %v491 = vld [vmem:[%s6] sm:$0x1]
        %v493 = vlaneseq
        %v494 = vshrl.u32 %v493, 7
        %v495 = vsub.s32 0, %v494
        %v496 = vrot.slane %v491, %v495
        %v498 = vadd.f32 %v483, %v496
        %v499 = vadd.f32 %v484, %v496
        %v500 = vadd.f32 %v485, %v496
        %v501 = vadd.f32 %v486, %v496
        %v502 = vadd.f32 %v487, %v496
        %v503 = vadd.f32 %v488, %v496
        %v504 = vadd.f32 %v489, %v496
        %v505 = vadd.f32 %v490, %v496
        %v506 = vmax.f32 %v498, 0.0
        %v507 = vmax.f32 %v499, 0.0
        %v508 = vmax.f32 %v500, 0.0
        %v509 = vmax.f32 %v501, 0.0
        %v510 = vmax.f32 %v502, 0.0
        %v511 = vmax.f32 %v503, 0.0
        %v512 = vmax.f32 %v504, 0.0
        %v513 = vmax.f32 %v505, 0.0
        %v514 = vpack.c.bf16 %v507, %v506
        %v515 = vpack.c.bf16 %v509, %v508
        %v516 = vpack.c.bf16 %v511, %v510
        %v517 = vpack.c.bf16 %v513, %v512
        %v522 = vunpack.c.l.b16 %v514
        %v523 = vunpack.c.h.b16 %v514
        %v524 = vunpack.c.l.b16 %v515
        %v525 = vunpack.c.h.b16 %v515
        %v526 = vunpack.c.l.b16 %v516
        %v527 = vunpack.c.h.b16 %v516
        %v528 = vunpack.c.l.b16 %v517
        %v529 = vunpack.c.h.b16 %v517
        %v530 = vpack.c.b16 %v522, %v522
        %v531 = vpack.c.b16 %v523, %v523
        %v532 = vpack.c.b16 %v524, %v524
        %v533 = vpack.c.b16 %v525, %v525
        %v534 = vpack.c.b16 %v526, %v526
        %v535 = vpack.c.b16 %v527, %v527
        %v536 = vpack.c.b16 %v528, %v528
        %v537 = vpack.c.b16 %v529, %v529
        %546 = vst [vmem:[#allocation3] sm:$0xf] %v530
        %547 = vst [vmem:[#allocation3 + $0x4] sm:$0xf] %v531
        %548 = vst [vmem:[#allocation3 + $0x8] sm:$0xf] %v532
        %549 = vst [vmem:[#allocation3 + $0xc] sm:$0xf] %v533
        %550 = vst [vmem:[#allocation3 + $0x10] sm:$0xf] %v534
        %551 = vst [vmem:[#allocation3 + $0x14] sm:$0xf] %v535
        %552 = vst [vmem:[#allocation3 + $0x18] sm:$0xf] %v536
        %553 = vst [vmem:[#allocation3 + $0x1c] sm:$0xf] %v537
        %v554 = vld [vmem:[%s323] sm:$0x7]
        %v555 = vmul.f32 %v554, %v554
        %v557 = vrot.slane %v555, 1
        %v559 = vadd.f32 %v555, %v557
        %v560 = vrot.slane %v555, 2
        %v562 = vadd.f32 %v559, %v560
        loop: start=0, step=1, limit=16
        $region45: #{tpu_custom_call.1} parent=43 // loop_pre_header
          _
        $region46: #{tpu_custom_call.1} parent=43 // loop_header
          %s564 = sphi 0, %s568
          %p565 = scmp.ge.s32.totalorder %s564, 16
          %s569 = sphi 0, %s615
          %v570 = vphi inf, %v611
        $region47: #{tpu_custom_call.1} parent=43 // loop_header_branch
          %567 = sbr.rel (%p565) target = $region51
        $region48: #{tpu_custom_call.1} parent=43 // loop_body
          %s571 = scalar_lea.vmem %s319, %s569
          %v572 = vld [vmem:[%s571] sm:$0x1]
          %s573 = scalar_lea.vmem %s333, %s564
          %vm574 = vcmask 16384
          %575 = vst.msk [vmem:[%s573] sm:$0x1] %vm574, %v572
          %s576 = sadd.s32 %s335, %s569
          %s577 = sld [smem:[#allocation6 + %s576]]
          %s578 = sadd.s32 %s335, 64
          %s579 = sadd.s32 %s578, %s569
          %s580 = sld [smem:[#allocation6 + %s579]]
          %s581 = sadd.s32 %s335, 128
          %s582 = sadd.s32 %s581, %s569
          %s583 = sld [smem:[#allocation6 + %s582]]
          %s584 = smul.f32 %s577, %s577
          %s585 = smul.f32 %s580, %s580
          %s586 = sadd.f32 %s584, %s585
          %s587 = smul.f32 %s583, %s583
          %s588 = sadd.f32 %s586, %s587
          %v589 = vstv %s588
          %v590 = vadd.f32 %v562, %v589
          %v591 = vstv %s577
          %v592 = vmul.f32 %v591, %v554
          %v593 = vstv %s580
          %v594 = vmul.f32 %v593, %v554
          %v596 = vrot.slane %v594, 1
          %v598 = vadd.f32 %v592, %v596
          %v599 = vstv %s583
          %v600 = vmul.f32 %v599, %v554
          %v602 = vrot.slane %v600, 2
          %v604 = vadd.f32 %v598, %v602
          %v605 = vmul.f32 %v604, 2.0
          %v606 = vsub.f32 %v590, %v605
          %v607 = vmax.f32 %v606, 0.0
          %s608 = scalar_lea.vmem [#allocation2], %s564
          %vm609 = vcmask 516096
          %610 = vst.msk [vmem:[%s608] sm:$0x1] %vm609, %v607
          %v611 = vmin.f32 %v570, %v607
          %v612 = vsel %vm609, %v611, -inf
          %613 = vmax.index.xlane.f32.xlu0 %v612
          %v614 = vpop.xlane.xlu0 %613
          %s615 = vtos %v614
        $region49: #{tpu_custom_call.1} parent=43 // loop_footer
          %s568 = sadd.s32 1, %s564
        $region50: #{tpu_custom_call.1} parent=43 // loop_footer_branch
          %563 = sbr.rel target = $region46
        $region51: #{tpu_custom_call.1} parent=43 // loop_exit
          _
        %v616 = vlaneseq
        %v617 = vand.u32 %v616, 127
        %618 = vst [vmem:[#allocation4] sm:$0xff] -inf
        %619 = vst [vmem:[#allocation4 + $0x8] sm:$0xff] -inf
        loop: start=0, step=1, limit=16
        $region52: #{tpu_custom_call.1} parent=43 // loop_pre_header
          _
        $region53: #{tpu_custom_call.1} parent=43 // loop_header
          %s621 = sphi 0, %s625
          %p622 = scmp.ge.s32.totalorder %s621, 16
        $region54: #{tpu_custom_call.1} parent=43 // loop_header_branch
          %624 = sbr.rel (%p622) target = $region58
        $region55: #{tpu_custom_call.1} parent=43 // loop_body
          %v626 = vld [vmem:[#allocation2] sm:$0xff]
          %v627 = vld [vmem:[#allocation2 + $0x8] sm:$0xff]
          %vm628 = vcmask 523264
          %v629 = vsel %vm628, %v626, inf
          %630 = vmin.index.xlane.f32.xlu0 %v629
          %v631 = vpop.xlane.xlu0 %630
          %v632 = vsel %vm628, %v627, inf
          %633 = vmin.index.xlane.f32.xlu0 %v632
          %v634 = vpop.xlane.xlu0 %633
          %vm635 = vcmp.eq.s32.totalorder %v617, %v631
          %vm636 = vcmp.eq.s32.totalorder %v617, %v634
          %v637 = vsel %vm635, 1, 0
          %v638 = vsel %vm636, 1, 0
          %v639 = vcvt.s32.f32 %v637
          %v640 = vcvt.s32.f32 %v638
          %v641 = vpack.c.bf16 %v640, %v639
          %v642 = vld [vmem:[#allocation3] sm:$0xf]
          %v643 = vld [vmem:[#allocation3 + $0x4] sm:$0xf]
          %v644 = vld [vmem:[#allocation3 + $0x8] sm:$0xf]
          %v645 = vld [vmem:[#allocation3 + $0xc] sm:$0xf]
          %v646 = vld [vmem:[#allocation3 + $0x10] sm:$0xf]
          %v647 = vld [vmem:[#allocation3 + $0x14] sm:$0xf]
          %v648 = vld [vmem:[#allocation3 + $0x18] sm:$0xf]
          %v649 = vld [vmem:[#allocation3 + $0x1c] sm:$0xf]
          %v658 = vunpack.c.l.b16 %v642
          %v659 = vunpack.c.l.b16 %v643
          %v660 = vunpack.c.l.b16 %v644
          %v661 = vunpack.c.l.b16 %v645
          %v662 = vunpack.c.l.b16 %v646
          %v663 = vunpack.c.l.b16 %v647
          %v664 = vunpack.c.l.b16 %v648
          %v665 = vunpack.c.l.b16 %v649
          %v666 = vpack.c.b16 %v659, %v658
          %v667 = vpack.c.b16 %v661, %v660
          %v668 = vpack.c.b16 %v663, %v662
          %v669 = vpack.c.b16 %v665, %v664
          %v675 = vsel %vm628, %v641, 0
          %677 = vmatprep.subr.bf16.mxu0 0
          %678 = vmatpush1.bf16.msra.mxu0 0
          %679 = vmatprep.subr.bf16.mxu0 0
          %680 = vmatpush1.bf16.msra.mxu0 0
          %681 = vmatprep.subr.bf16.mxu0 0
          %682 = vmatpush1.bf16.msra.mxu0 0
          %683 = vmatprep.subr.bf16.mxu0 0
          %684 = vmatpush1.bf16.msra.mxu0 0
          %685 = vmatprep.subr.bf16.mxu0 0
          %686 = vmatpush1.bf16.msra.mxu0 %v669
          %687 = vmatprep.subr.bf16.mxu0 0
          %688 = vmatpush1.bf16.msra.mxu0 %v668
          %689 = vmatprep.subr.bf16.mxu0 0
          %690 = vmatpush1.bf16.msra.mxu0 %v667
          %691 = vmatprep.subr.bf16.mxu0 0
          %692 = vmatpush1.bf16.msra.mxu0 %v666
          %693 = vmatprep.subr.bf16.mxu0 0
          %694 = vmatpush2.bf16.msra.mxu0 0
          %695 = vmatprep.subr.bf16.mxu0 0
          %696 = vmatpush2.bf16.msra.mxu0 0
          %697 = vmatprep.subr.bf16.mxu0 0
          %698 = vmatpush2.bf16.msra.mxu0 0
          %699 = vmatprep.subr.bf16.mxu0 0
          %700 = vmatpush2.bf16.msra.mxu0 0
          %701 = vmatprep.subr.bf16.mxu0 0
          %702 = vmatpush2.bf16.msra.mxu0 0
          %703 = vmatprep.subr.bf16.mxu0 0
          %704 = vmatpush2.bf16.msra.mxu0 0
          %705 = vmatprep.subr.bf16.mxu0 0
          %706 = vmatpush2.bf16.msra.mxu0 0
          %707 = vmatprep.subr.bf16.mxu0 0
          %708 = vmatpush2.bf16.msra.mxu0 0
          %709 = vmatprep.mubr.bf16.mxu0 0
          %710 = vmatmul.mubr.bf16.gmra.mxu0 %v675
          %v711 = vpop.f32.mrf.mxu0
          %v712 = vadd.f32 0.0, %v711
          %v713 = vpop.f32.mrf.mxu0
          %v714 = vpop.f32.mrf.mxu0
          %v715 = vadd.f32 0.0, %v714
          %v716 = vpop.f32.mrf.mxu0
          %717 = vdwg.mxu0
          %v718 = vld [vmem:[#allocation4] sm:$0xff]
          %v719 = vld [vmem:[#allocation4 + $0x8] sm:$0xff]
          %v720 = vmax.f32 %v718, %v712
          %v721 = vmax.f32 %v719, %v715
          %722 = vst [vmem:[#allocation4] sm:$0xff] %v720
          %723 = vst [vmem:[#allocation4 + $0x8] sm:$0xff] %v721
          %v724 = vmul.f32 %v639, 1e+30
          %v725 = vmul.f32 %v640, 1e+30
          %v726 = vadd.f32 %v626, %v724
          %v727 = vadd.f32 %v627, %v725
          %728 = vst.msk [vmem:[#allocation2] sm:$0xff] %vm628, %v726
          %729 = vst.msk [vmem:[#allocation2 + $0x8] sm:$0xff] %vm628, %v727
        $region56: #{tpu_custom_call.1} parent=43 // loop_footer
          %s625 = sadd.s32 1, %s621
        $region57: #{tpu_custom_call.1} parent=43 // loop_footer_branch
          %620 = sbr.rel target = $region53
        $region58: #{tpu_custom_call.1} parent=43 // loop_exit
          _
        %v730 = vld [vmem:[#allocation4] sm:$0xff]
        %v731 = vld [vmem:[#allocation4 + $0x8] sm:$0xff]
        %732 = vst [vmem:[%s307] sm:$0xff] %v730
        %733 = vst [vmem:[%s307 + $0x8] sm:$0xff] %v731
        %s734 = sand.u32 %s178, 1
        %s735 = scalar_lea.sflag [#allocation8], %s734
        %s736 = sand.u32 %s178, 1
        %s737 = smul.addr %s736, 16
        %s738 = scalar_lea.vmem [#allocation7], %s737
        %p739 = scmp.lt.s32.totalorder %s29, 1
        %s740 = scalar_select %p739, %s29, 1
        %s741 = smul.addr %s740, 2
        %s742 = smul.addr %s741, 8
        %s743 = scalar_lea.vmem %s8, %s742
        // Predicated region
        $region59: #{tpu_custom_call.1} parent=43 // pred_check
          %p744 = pneg %p188
        $region60: #{tpu_custom_call.1} parent=43 // pred_check_branch
          %746 = sbr.rel (%p744) target = $region62
        $region61: #{tpu_custom_call.1} parent=43 // pred_region
          %s748 = ssub.s32 256, 256
          %749 = vsyncadd %s735, %s748
          %s750 = smul.addr %s29, 2
          %s751 = smul.addr %s750, 128
          %s752 = scalar_lea.hbm %s7, %s751
          %s753 = sshll.u32 %s738, 4
          %s754 = int_to_ptr.vmem [resolvable:$true] %s753
          %759 = dma.vmem_to_hbm [thread:$0]  %s754, 256, %s752, %s735, 128, 128, 8
        $region62: #{tpu_custom_call.1} parent=43 // pred_fallthru
          _
        // Predicated region
        $region63: #{tpu_custom_call.1} parent=43 // pred_check
          %p760 = pneg %p214
        $region64: #{tpu_custom_call.1} parent=43 // pred_check_branch
          %762 = sbr.rel (%p760) target = $region66
        $region65: #{tpu_custom_call.1} parent=43 // pred_region
          _
        $region66: #{tpu_custom_call.1} parent=43 // pred_fallthru
          _
      $region44: #{tpu_custom_call.1} parent=5 // pred_fallthru
        _
      %p763 = scmp.le.s32.totalorder 2, %s24
      // Predicated region
      $region67: #{tpu_custom_call.1} parent=5 // pred_check
        %p764 = pneg %p763
      $region68: #{tpu_custom_call.1} parent=5 // pred_check_branch
        %766 = sbr.rel (%p764) target = $region70
      $region69: #{tpu_custom_call.1} parent=5 // pred_region
        %s767 = ssub.s32 %s24, 2
        // Predicated region
        $region71: #{tpu_custom_call.1} parent=69 // pred_check
          %p768 = pneg %p194
        $region72: #{tpu_custom_call.1} parent=69 // pred_check_branch
          %770 = sbr.rel (%p768) target = $region74
        $region73: #{tpu_custom_call.1} parent=69 // pred_region
          %s771 = sand.u32 %s179, 1
          %s772 = scalar_lea.sflag [#allocation8], %s771
          %s773 = sand.u32 %s179, 1
          %s774 = smul.addr %s773, 16
          %s775 = scalar_lea.vmem [#allocation7], %s774
          %776 = dma.done %s772, 256
        $region74: #{tpu_custom_call.1} parent=69 // pred_fallthru
          _
        // Predicated region
        $region75: #{tpu_custom_call.1} parent=69 // pred_check
          %p777 = pneg %p220
        $region76: #{tpu_custom_call.1} parent=69 // pred_check_branch
          %779 = sbr.rel (%p777) target = $region78
        $region77: #{tpu_custom_call.1} parent=69 // pred_region
          %p780 = scmp.lt.s32.totalorder %s30, 1
          %s781 = scalar_select %p780, %s30, 1
          %s782 = smul.addr %s781, 2
          %s783 = smul.addr %s782, 8
          %s784 = scalar_lea.vmem %s8, %s783
        $region78: #{tpu_custom_call.1} parent=69 // pred_fallthru
          _
      $region70: #{tpu_custom_call.1} parent=5 // pred_fallthru
        _
    $region6: #{tpu_custom_call.1} parent=1 // loop_footer
      %s28 = sadd.s32 1, %s24
    $region7: #{tpu_custom_call.1} parent=1 // loop_footer_branch
      %23 = sbr.rel target = $region3
    $region8: #{tpu_custom_call.1} parent=1 // loop_exit
      _
    %785 = vsyncpa [#allocation8], 1
    %s786 = scalar_lea.sflag [#allocation8], 1
    %787 = vsyncpa %s786, 1

</llo_original>
